<compile_context>
chip_gen: v6e
topology: v6e:2x2x1
jax: 0.10.0
libtpu: 0.0.40
codegen_flags: <defaults>
</compile_context>

<pallas_src>
import functools

import jax
import jax.numpy as jnp
from jax import lax
from jax.experimental import pallas as pl
from jax.experimental.pallas import tpu as pltpu


def _round_up(x, m):
    return ((x + m - 1) // m) * m


def _mix_bits(row_u32, col_u32, seed_u32):
    """Stateless hash -> uniform uint32 bits (fallback path only)."""
    x = row_u32 * jnp.uint32(0x9E3779B1)
    x = x ^ (col_u32 * jnp.uint32(0x85EBCA77))
    x = x ^ seed_u32
    x = x ^ (x >> jnp.uint32(16))
    x = x * jnp.uint32(0x7FEB352D)
    x = x ^ (x >> jnp.uint32(15))
    x = x * jnp.uint32(0x846CA68B)
    x = x ^ (x >> jnp.uint32(16))
    return x


def _embed_kernel(ids_ref, tok_ref, pos_ref, out_ref, gat_ref, *,
                  tq, seq_pad, dropout_p, keep_threshold, base_seed,
                  use_hw_prng):
    """One grid step = rows [j*TQ, (j+1)*TQ) of batch element b.

    ids_ref : (B*seq_pad,) int32 SMEM (scalar prefetch) -- flattened token ids.
    tok_ref : (V, D)      f32 VMEM-resident token table (single copy).
    pos_ref : (seq_pad,D) f32 VMEM-resident positional slab (single copy).
    out_ref : (TQ, D)     f32 output tile.
    gat_ref : (TQ, D)     f32 scratch holding the gathered token rows.
    """
    b = pl.program_id(0)
    j = pl.program_id(1)
    row0 = pl.multiple_of(j * tq, 8)          # first position in this tile
    base = b * seq_pad + row0                 # first flat id index in SMEM

    # --- token-row gather into scratch (only thing left in the serial loop) ---
    def gather_row(r, carry):
        tok_id = ids_ref[base + r]                         # scalar SMEM read
        gat_ref[pl.ds(r, 1), :] = tok_ref[pl.ds(tok_id, 1), :]
        return carry

    lax.fori_loop(0, tq, gather_row, 0, unroll=8)

    # --- one dense pass: pos add (+ dropout) fused into a single store ---
    x = gat_ref[...] + pos_ref[pl.ds(row0, tq), :]         # (TQ, D) VPU add

    if dropout_p > 0.0:
        d = out_ref.shape[1]
        if use_hw_prng:
            pltpu.prng_seed(base_seed, b, j)
            bits = pltpu.bitcast(pltpu.prng_random_bits((tq, d)), jnp.uint32)
        else:
            # Fallback: stateless hash keyed on absolute (row, col).
            r_abs = (lax.broadcasted_iota(jnp.int32, (tq, d), 0)
                     + base).astype(jnp.uint32)
            c = lax.broadcasted_iota(jnp.uint32, (tq, d), 1)
            bits = _mix_bits(r_abs, c, jnp.uint32(base_seed))
        keep = bits >= jnp.uint32(keep_threshold)          # P(keep) = 1 - p
        scale = jnp.float32(1.0 / (1.0 - dropout_p))
        out_ref[...] = jnp.where(keep, x * scale, jnp.float32(0.0))
    else:
        out_ref[...] = x


def input_embedding(ids, tok_table, pos_table, *,
                    dropout_p=0.1, base_seed=1234, tile_rows=512,
                    use_hw_prng=True):
    """Pallas implementation of InputEmbedding.forward.

    ids       : (B, S) int token ids
    tok_table : (V, D) float32  (firstEmbedding.weight)
    pos_table : (Vp, D) float32 (secondEmbedding.weight; rows 0..S-1 used)
    returns   : (B, S, D) float32
    """
    B, S = ids.shape
    V, D = tok_table.shape
    assert pos_table.shape[1] == D
    assert S <= pos_table.shape[0], "positional table must cover the sequence"
    assert 0.0 <= dropout_p < 1.0
    assert D % 128 == 0, "embed dim must be a multiple of 128"

    tq = _round_up(min(tile_rows, _round_up(S, 8)), 8)     # rows per tile
    seq_pad = _round_up(S, tq)
    n_seq_tiles = seq_pad // tq

    ids32 = jnp.clip(ids.astype(jnp.int32), 0, V - 1)      # bounds-check gather
    if seq_pad != S:
        ids32 = jnp.pad(ids32, ((0, 0), (0, seq_pad - S)))
    ids_flat = ids32.reshape(-1)

    pos_slab = pos_table[:S].astype(jnp.float32)            # only rows used
    if seq_pad != S:
        pos_slab = jnp.pad(pos_slab, ((0, seq_pad - S), (0, 0)))

    # Clamp so p very close to 1 cannot wrap the uint32 threshold to 0.
    keep_threshold = min(int(round(dropout_p * 2.0 ** 32)), 2 ** 32 - 1)

    tok_bytes = V * D * 4                                    # single copy
    pos_bytes = seq_pad * D * 4                              # single copy
    tile_bytes = tq * D * 4                                  # out x2 + scratch x1
    vmem_limit = min(tok_bytes + pos_bytes + 3 * tile_bytes + (16 << 20),
                     100 << 20)

    def _call(hw_prng):
        kernel = functools.partial(
            _embed_kernel, tq=tq, seq_pad=seq_pad, dropout_p=float(dropout_p),
            keep_threshold=keep_threshold,
            base_seed=int(base_seed) & 0x7FFFFFFF, use_hw_prng=hw_prng)
        return pl.pallas_call(
            kernel,
            out_shape=jax.ShapeDtypeStruct((B, seq_pad, D), jnp.float32),
            grid_spec=pltpu.PrefetchScalarGridSpec(
                num_scalar_prefetch=1,                       # ids -> SMEM
                grid=(B, n_seq_tiles),
                in_specs=[
                    # Whole-array VMEM residency: one copy, DMA'd once, no
                    # implicit double-buffering (Buffered(1)-equivalent).
                    pl.BlockSpec(memory_space=pltpu.MemorySpace.VMEM),  # tok
                    pl.BlockSpec(memory_space=pltpu.MemorySpace.VMEM),  # pos
                ],
                out_specs=pl.BlockSpec((None, tq, D),
                                       lambda b, j, ids: (b, j, 0)),
                scratch_shapes=[pltpu.VMEM((tq, D), jnp.float32)],
            ),
            # Row-tile axes are independent; on v7x CORE_PARALLEL on the batch
            # axis would split tiles across the 2 TCs (kept "parallel" here for
            # portability across v5e/v6e/v7x).
            compiler_params=pltpu.CompilerParams(
                dimension_semantics=("parallel", "parallel"),
                vmem_limit_bytes=vmem_limit),
        )(ids_flat, tok_table.astype(jnp.float32), pos_slab)

    if dropout_p > 0.0 and use_hw_prng:
        try:
            out = _call(True)
        except Exception:
            # Hardware PRNG unavailable (e.g. interpret mode): stateless hash.
            out = _call(False)
    else:
        out = _call(False)

    return out[:, :S, :]


if __name__ == "__main__":
    # Small shapes consistent with the module (vocab 7000 -> 64, embed 512 -> 128).
    B, S = 2, 8
    VOCAB, EMBED = 64, 128
    DROPOUT = 0.1
    SEED = 1234

    key = jax.random.PRNGKey(0)
    k_ids, k_tok, k_pos = jax.random.split(key, 3)

    ids = jax.random.randint(k_ids, (B, S), 0, VOCAB, dtype=jnp.int32)
    tok_table = jax.random.normal(k_tok, (VOCAB, EMBED), dtype=jnp.float32)
    pos_table = jax.random.normal(k_pos, (VOCAB, EMBED), dtype=jnp.float32)

    # Pure-JAX reference for the deterministic part (gather + positional add).
    base = tok_table[ids] + pos_table[jnp.arange(S)][None, :, :]      # (B,S,D)

    # Inference path (p = 0): must match exactly.
    out_eval = jax.block_until_ready(
        input_embedding(ids, tok_table, pos_table, dropout_p=0.0))
    assert out_eval.shape == (B, S, EMBED) and out_eval.dtype == jnp.float32
    assert jnp.allclose(out_eval, base, atol=1e-5, rtol=1e-5)

    # Training path (p = 0.1): every element is either dropped (0) or
    # base / (1 - p); keep-fraction should be roughly 1 - p.
    out = jax.block_until_ready(
        input_embedding(ids, tok_table, pos_table,
                        dropout_p=DROPOUT, base_seed=SEED))
    assert out.shape == (B, S, EMBED) and out.dtype == jnp.float32
    scaled = base / (1.0 - DROPOUT)
    is_zero = jnp.abs(out) <= 1e-6
    is_kept = jnp.abs(out - scaled) <= 1e-4 + 1e-5 * jnp.abs(scaled)
    assert bool(jnp.all(is_zero | is_kept))
    keep_frac = float(jnp.mean(is_kept.astype(jnp.float32)))
    assert 0.75 <= keep_frac <= 0.995, keep_frac

    print("KERNEL_OK")
</pallas_src>

<mosaic_0001>
module attributes {stable_mosaic.version = 11 : i64} {
  func.func @_embed_kernel(%arg0: i32, %arg1: i32, %arg2: memref<16xi32, #tpu.memory_space<smem>>, %arg3: memref<64x128xf32, #tpu.memory_space<vmem>>, %arg4: memref<8x128xf32, #tpu.memory_space<vmem>>, %arg5: memref<1x8x128xf32, #tpu.memory_space<vmem>>, %arg6: memref<8x128xf32, #tpu.memory_space<vmem>>) attributes {dimension_semantics = [#tpu.dimension_semantics<parallel>, #tpu.dimension_semantics<parallel>], iteration_bounds = array<i64: 2, 1>, scalar_prefetch = 1 : i64, scratch_operands = 1 : i64, tpu.core_type = #tpu.core_type<tc>, window_params = [{pipeline_mode = #tpu.pipeline_mode<synchronous>, transform_indices = @transform_0, window_bounds = array<i64: 64, 128>}, {pipeline_mode = #tpu.pipeline_mode<synchronous>, transform_indices = @transform_1, window_bounds = array<i64: 8, 128>}, {transform_indices = @transform_2, window_bounds = array<i64: 1, 8, 128>}]} {
    %c8_i32 = arith.constant 8 : i32
    %0 = arith.muli %arg1, %c8_i32 : i32
    %1 = tpu.assume_multiple %0, 8 : i32
    %c8_i32_0 = arith.constant 8 : i32
    %2 = arith.muli %arg0, %c8_i32_0 : i32
    %3 = arith.addi %2, %1 : i32
    %c0_i32 = arith.constant 0 : i32
    %4 = arith.addi %3, %c0_i32 : i32
    %5 = arith.index_cast %4 : i32 to index
    %6 = memref.load %arg2[%5] : memref<16xi32, #tpu.memory_space<smem>>
    %7 = arith.index_cast %6 : i32 to index
    %c0 = arith.constant 0 : index
    %8 = vector.load %arg3[%7, %c0] : memref<64x128xf32, #tpu.memory_space<vmem>>, vector<1x128xf32>
    %9 = arith.index_cast %c0_i32 : i32 to index
    %c0_1 = arith.constant 0 : index
    %10 = vector.load %arg6[%9, %c0_1] : memref<8x128xf32, #tpu.memory_space<vmem>>, vector<1x128xf32>
    tpu.vector_store %arg6[%9, %c0_1], %8 {strides = array<i32>} : memref<8x128xf32, #tpu.memory_space<vmem>>, vector<1x128xf32>,
    %c1_i32 = arith.constant 1 : i32
    %11 = arith.addi %3, %c1_i32 : i32
    %12 = arith.index_cast %11 : i32 to index
    %13 = memref.load %arg2[%12] : memref<16xi32, #tpu.memory_space<smem>>
    %14 = arith.index_cast %13 : i32 to index
    %c0_2 = arith.constant 0 : index
    %15 = vector.load %arg3[%14, %c0_2] : memref<64x128xf32, #tpu.memory_space<vmem>>, vector<1x128xf32>
    %16 = arith.index_cast %c1_i32 : i32 to index
    %c0_3 = arith.constant 0 : index
    %17 = vector.load %arg6[%16, %c0_3] : memref<8x128xf32, #tpu.memory_space<vmem>>, vector<1x128xf32>
    tpu.vector_store %arg6[%16, %c0_3], %15 {strides = array<i32>} : memref<8x128xf32, #tpu.memory_space<vmem>>, vector<1x128xf32>,
    %c2_i32 = arith.constant 2 : i32
    %18 = arith.addi %3, %c2_i32 : i32
    %19 = arith.index_cast %18 : i32 to index
    %20 = memref.load %arg2[%19] : memref<16xi32, #tpu.memory_space<smem>>
    %21 = arith.index_cast %20 : i32 to index
    %c0_4 = arith.constant 0 : index
    %22 = vector.load %arg3[%21, %c0_4] : memref<64x128xf32, #tpu.memory_space<vmem>>, vector<1x128xf32>
    %23 = arith.index_cast %c2_i32 : i32 to index
    %c0_5 = arith.constant 0 : index
    %24 = vector.load %arg6[%23, %c0_5] : memref<8x128xf32, #tpu.memory_space<vmem>>, vector<1x128xf32>
    tpu.vector_store %arg6[%23, %c0_5], %22 {strides = array<i32>} : memref<8x128xf32, #tpu.memory_space<vmem>>, vector<1x128xf32>,
    %c3_i32 = arith.constant 3 : i32
    %25 = arith.addi %3, %c3_i32 : i32
    %26 = arith.index_cast %25 : i32 to index
    %27 = memref.load %arg2[%26] : memref<16xi32, #tpu.memory_space<smem>>
    %28 = arith.index_cast %27 : i32 to index
    %c0_6 = arith.constant 0 : index
    %29 = vector.load %arg3[%28, %c0_6] : memref<64x128xf32, #tpu.memory_space<vmem>>, vector<1x128xf32>
    %30 = arith.index_cast %c3_i32 : i32 to index
    %c0_7 = arith.constant 0 : index
    %31 = vector.load %arg6[%30, %c0_7] : memref<8x128xf32, #tpu.memory_space<vmem>>, vector<1x128xf32>
    tpu.vector_store %arg6[%30, %c0_7], %29 {strides = array<i32>} : memref<8x128xf32, #tpu.memory_space<vmem>>, vector<1x128xf32>,
    %c4_i32 = arith.constant 4 : i32
    %32 = arith.addi %3, %c4_i32 : i32
    %33 = arith.index_cast %32 : i32 to index
    %34 = memref.load %arg2[%33] : memref<16xi32, #tpu.memory_space<smem>>
    %35 = arith.index_cast %34 : i32 to index
    %c0_8 = arith.constant 0 : index
    %36 = vector.load %arg3[%35, %c0_8] : memref<64x128xf32, #tpu.memory_space<vmem>>, vector<1x128xf32>
    %37 = arith.index_cast %c4_i32 : i32 to index
    %c0_9 = arith.constant 0 : index
    %38 = vector.load %arg6[%37, %c0_9] : memref<8x128xf32, #tpu.memory_space<vmem>>, vector<1x128xf32>
    tpu.vector_store %arg6[%37, %c0_9], %36 {strides = array<i32>} : memref<8x128xf32, #tpu.memory_space<vmem>>, vector<1x128xf32>,
    %c5_i32 = arith.constant 5 : i32
    %39 = arith.addi %3, %c5_i32 : i32
    %40 = arith.index_cast %39 : i32 to index
    %41 = memref.load %arg2[%40] : memref<16xi32, #tpu.memory_space<smem>>
    %42 = arith.index_cast %41 : i32 to index
    %c0_10 = arith.constant 0 : index
    %43 = vector.load %arg3[%42, %c0_10] : memref<64x128xf32, #tpu.memory_space<vmem>>, vector<1x128xf32>
    %44 = arith.index_cast %c5_i32 : i32 to index
    %c0_11 = arith.constant 0 : index
    %45 = vector.load %arg6[%44, %c0_11] : memref<8x128xf32, #tpu.memory_space<vmem>>, vector<1x128xf32>
    tpu.vector_store %arg6[%44, %c0_11], %43 {strides = array<i32>} : memref<8x128xf32, #tpu.memory_space<vmem>>, vector<1x128xf32>,
    %c6_i32 = arith.constant 6 : i32
    %46 = arith.addi %3, %c6_i32 : i32
    %47 = arith.index_cast %46 : i32 to index
    %48 = memref.load %arg2[%47] : memref<16xi32, #tpu.memory_space<smem>>
    %49 = arith.index_cast %48 : i32 to index
    %c0_12 = arith.constant 0 : index
    %50 = vector.load %arg3[%49, %c0_12] : memref<64x128xf32, #tpu.memory_space<vmem>>, vector<1x128xf32>
    %51 = arith.index_cast %c6_i32 : i32 to index
    %c0_13 = arith.constant 0 : index
    %52 = vector.load %arg6[%51, %c0_13] : memref<8x128xf32, #tpu.memory_space<vmem>>, vector<1x128xf32>
    tpu.vector_store %arg6[%51, %c0_13], %50 {strides = array<i32>} : memref<8x128xf32, #tpu.memory_space<vmem>>, vector<1x128xf32>,
    %c7_i32 = arith.constant 7 : i32
    %53 = arith.addi %3, %c7_i32 : i32
    %54 = arith.index_cast %53 : i32 to index
    %55 = memref.load %arg2[%54] : memref<16xi32, #tpu.memory_space<smem>>
    %56 = arith.index_cast %55 : i32 to index
    %c0_14 = arith.constant 0 : index
    %57 = vector.load %arg3[%56, %c0_14] : memref<64x128xf32, #tpu.memory_space<vmem>>, vector<1x128xf32>
    %58 = arith.index_cast %c7_i32 : i32 to index
    %c0_15 = arith.constant 0 : index
    %59 = vector.load %arg6[%58, %c0_15] : memref<8x128xf32, #tpu.memory_space<vmem>>, vector<1x128xf32>
    tpu.vector_store %arg6[%58, %c0_15], %57 {strides = array<i32>} : memref<8x128xf32, #tpu.memory_space<vmem>>, vector<1x128xf32>,
    %c8_i32_16 = arith.constant 8 : i32
    %c0_17 = arith.constant 0 : index
    %c0_18 = arith.constant 0 : index
    %60 = vector.load %arg6[%c0_17, %c0_18] : memref<8x128xf32, #tpu.memory_space<vmem>>, vector<8x128xf32>
    %61 = arith.index_cast %1 : i32 to index
    %c0_19 = arith.constant 0 : index
    %62 = vector.load %arg4[%61, %c0_19] : memref<8x128xf32, #tpu.memory_space<vmem>>, vector<8x128xf32>
    %63 = arith.addf %60, %62 : vector<8x128xf32>
    %c0_20 = arith.constant 0 : index
    %c0_21 = arith.constant 0 : index
    %c0_22 = arith.constant 0 : index
    %64 = vector.load %arg5[%c0_20, %c0_21, %c0_22] : memref<1x8x128xf32, #tpu.memory_space<vmem>>, vector<1x8x128xf32>
    %65 = vector.shape_cast %64 : vector<1x8x128xf32> to vector<8x128xf32>
    %66 = vector.shape_cast %63 : vector<8x128xf32> to vector<1x8x128xf32>
    tpu.vector_store %arg5[%c0_20, %c0_21, %c0_22], %66 {strides = array<i32>} : memref<1x8x128xf32, #tpu.memory_space<vmem>>, vector<1x8x128xf32>,
    return
  }
  func.func @transform_0(%arg0: i32, %arg1: i32, %arg2: memref<16xi32, #tpu.memory_space<smem>>) -> (i32, i32) {
    %c0_i32 = arith.constant 0 : i32
    %c0_i32_0 = arith.constant 0 : i32
    %c0_i32_1 = arith.constant 0 : i32
    return %c0_i32, %c0_i32_0 : i32, i32
  }
  func.func @transform_1(%arg0: i32, %arg1: i32, %arg2: memref<16xi32, #tpu.memory_space<smem>>) -> (i32, i32) {
    %c0_i32 = arith.constant 0 : i32
    %c0_i32_0 = arith.constant 0 : i32
    %c0_i32_1 = arith.constant 0 : i32
    return %c0_i32, %c0_i32_0 : i32, i32
  }
  func.func @transform_2(%arg0: i32, %arg1: i32, %arg2: memref<16xi32, #tpu.memory_space<smem>>) -> (i32, i32, i32) {
    %c0_i32 = arith.constant 0 : i32
    %c0_i32_0 = arith.constant 0 : i32
    return %arg0, %arg1, %c0_i32 : i32, i32, i32
  }
}

</mosaic_0001>

<llo_original>
// kernel: tpu_custom_call.1
$region0: #{tpu_custom_call.1}
  #allocation0 [shape = 'u32[]', space=smem, size = 0x4, offset = 0x4, fixed_abs, tag = 'smem constant byte address 0x4 - core index']
  #allocation1 [shape = 'u32[144,128]{1,0:T(1,128)}', space=vmem, size = 0x12000, scoped, tag = 'internal scratch']
  #allocation2 [shape = 'f32[8,128]{1,0:T(8,128)}', space=vmem, size = 0x1000, scoped, tag = 'scratch operand']
  #allocation3 [shape = 's32[1]{0}', space=sflag, size = 0x4, scoped, tag = 'scoped memory for tpu_custom_call.1']
  #allocation4 [shape = 'u8[512]{0}', space=smem, size = 0x200, scoped, tag = 'prefetched SMEM operand 0']
  %s0 = inlined_call_operand.hbm [shape: s32[16], index: 0, kind: input, shape index: {}]
  %s1 = inlined_call_operand.hbm [shape: f32[64,128], index: 1, kind: input, shape index: {}]
  %s2 = inlined_call_operand.hbm [shape: f32[8,128], index: 2, kind: input, shape index: {}]
  %s3 = inlined_call_operand.hbm [shape: f32[2,8,128], index: 3, kind: output, shape index: {}]
  %s4 = sld [smem:[#allocation0]]
  $region49: #{tpu_custom_call.1} parent=0
    _
  %s6 = ssub.s32 1, %s4
  %s7 = scalar_select 0, %s6, %s4
  %9 = dma.hbm_to_smem %s0, 16, [#allocation4], [#allocation3]
  %10 = dma.done [#allocation3], 16
  %11 = sfence
  $region1: #{tpu_custom_call.1} parent=0
    #allocation5 [shape = 'u8[32768]{0}', space=vmem, size = 0x8000, scoped, tag = 'input window, operand 1, single buffered']
    #allocation6 [shape = 's32[2]{0}', space=sflag, size = 0x8, scoped, tag = 'scoped memory for tpu_custom_call.1']
    #allocation7 [shape = 's32[2]{0}', space=sflag, size = 0x8, scoped, tag = 'scoped memory for tpu_custom_call.1']
    #allocation8 [shape = 'u8[4096]{0}', space=vmem, size = 0x1000, scoped, tag = 'input window, operand 2, single buffered']
    #allocation9 [shape = 's32[1]{0}', space=sflag, size = 0x4, scoped, tag = 'scoped memory for tpu_custom_call.1']
    #allocation10 [shape = 'u8[8192]{0}', space=vmem, size = 0x2000, scoped, tag = 'output window, operand 0']
    %12 = vsyncpa [#allocation6], 0
    %13 = vsyncpa [#allocation9], 0
    %14 = vsyncpa [#allocation7], 0
    %s15 = scalar_lea.sflag [#allocation7], 1
    %16 = vsyncpa %s15, 0
    loop: start=0, step=1, limit=4
    $region2: #{tpu_custom_call.1} parent=1 // loop_pre_header
      _
    $region3: #{tpu_custom_call.1} parent=1 // loop_header
      %s18 = sphi 0, %s22
      %p19 = scmp.ge.s32.totalorder %s18, 4
      %s25 = sphi 0, %s37
      %s26 = sphi 0, %s33
      %s27 = sphi 0, %s25
      %s28 = sphi 0, %s26
      %s29 = sphi 0, %s27
      %s30 = sphi 0, %s28
      %s38 = sphi 0, %s38
      %s40 = sphi 0, %s38
      %s41 = sphi 0, %s40
      %s55 = sphi 0, %s41
      %s59 = sphi 0, %s59
      %s61 = sphi 0, %s59
      %s62 = sphi 0, %s61
      %s76 = sphi 0, %s62
      %s84 = sphi 0, %s86
      %s87 = sphi 0, %s84
      %s88 = sphi 0, %s87
      %s104 = sphi 0, %s88
    $region4: #{tpu_custom_call.1} parent=1 // loop_header_branch
      %21 = sbr.rel (%p19) target = $region8
    $region5: #{tpu_custom_call.1} parent=1 // loop_body
      %s23 = ssub.s32 %s18, 1
      %s24 = ssub.s32 %s18, 2
      %s31 = sadd.s32 1, %s26
      %p32 = scmp.ge.s32.totalorder %s31, 1
      %s33 = scalar_select %p32, 0, %s31
      %s34 = sadd.s32 1, %s25
      %s35 = scalar_select %p32, %s34, %s25
      %p36 = scmp.ge.s32.totalorder %s35, 2
      %s37 = scalar_select %p36, 0, %s35
      %s39 = sadd.s32 %s38, 1
      %p42 = scmp.eq.s32.totalorder %s18, 1
      %p43 = scmp.ne.s32.totalorder %s38, %s40
      %p44 = scmp.eq.s32.totalorder %s18, 0
      %p45 = por %p43, %p44
      %p46 = scmp.ne.s32.totalorder %s38, %s40
      %p47 = scmp.eq.s32.totalorder %s23, 1
      %p48 = por %p46, %p47
      %p49 = scmp.ne.s32.totalorder %s40, %s41
      %p50 = scmp.eq.s32.totalorder %s23, 0
      %p51 = por %p49, %p50
      %p52 = scmp.ne.s32.totalorder %s40, %s41
      %p53 = scmp.eq.s32.totalorder %s24, 1
      %p54 = por %p52, %p53
      %p56 = scmp.ne.s32.totalorder %s41, %s55
      %p57 = scmp.eq.s32.totalorder %s24, 0
      %p58 = por %p56, %p57
      %s60 = sadd.s32 %s59, 1
      %p63 = scmp.eq.s32.totalorder %s18, 1
      %p64 = scmp.ne.s32.totalorder %s59, %s61
      %p65 = scmp.eq.s32.totalorder %s18, 0
      %p66 = por %p64, %p65
      %p67 = scmp.ne.s32.totalorder %s59, %s61
      %p68 = scmp.eq.s32.totalorder %s23, 1
      %p69 = por %p67, %p68
      %p70 = scmp.ne.s32.totalorder %s61, %s62
      %p71 = scmp.eq.s32.totalorder %s23, 0
      %p72 = por %p70, %p71
      %p73 = scmp.ne.s32.totalorder %s61, %s62
      %p74 = scmp.eq.s32.totalorder %s24, 1
      %p75 = por %p73, %p74
      %p77 = scmp.ne.s32.totalorder %s62, %s76
      %p78 = scmp.eq.s32.totalorder %s24, 0
      %p79 = por %p77, %p78
      %s80 = ssub.s32 %s25, %s37
      %s81 = ssub.s32 %s26, %s33
      %s82 = sor.u32 %s80, %s81
      %p83 = scmp.eq.s32.totalorder %s82, 0
      %s85 = sadd.s32 %s84, 1
      %s86 = scalar_select %p83, %s84, %s85
      %p89 = pneg %p83
      %p90 = scmp.eq.s32.totalorder %s18, 1
      %p91 = por %p89, %p90
      %p92 = scmp.ne.s32.totalorder %s84, %s87
      %p93 = scmp.eq.s32.totalorder %s18, 0
      %p94 = por %p92, %p93
      %p95 = scmp.ne.s32.totalorder %s84, %s87
      %p96 = scmp.eq.s32.totalorder %s23, 1
      %p97 = por %p95, %p96
      %p98 = scmp.ne.s32.totalorder %s87, %s88
      %p99 = scmp.eq.s32.totalorder %s23, 0
      %p100 = por %p98, %p99
      %p101 = scmp.ne.s32.totalorder %s87, %s88
      %p102 = scmp.eq.s32.totalorder %s24, 1
      %p103 = por %p101, %p102
      %p105 = scmp.ne.s32.totalorder %s88, %s104
      %p106 = scmp.eq.s32.totalorder %s24, 0
      %p107 = por %p105, %p106
      %p108 = scmp.le.s32.totalorder 1, %s18
      %p109 = scmp.lt.s32.totalorder %s18, 3
      %p110 = pnand %p108, %p109
      %p111 = pneg %p110
      // Predicated region
      $region9: #{tpu_custom_call.1} parent=5 // pred_check
        _
      $region10: #{tpu_custom_call.1} parent=5 // pred_check_branch
        %113 = sbr.rel (%p110) target = $region12
      $region11: #{tpu_custom_call.1} parent=5 // pred_region
        %s114 = ssub.s32 %s18, 1
        // Predicated region
        $region13: #{tpu_custom_call.1} parent=11 // pred_check
          %p115 = pneg %p51
        $region14: #{tpu_custom_call.1} parent=11 // pred_check_branch
          %117 = sbr.rel (%p115) target = $region16
        $region15: #{tpu_custom_call.1} parent=11 // pred_region
          %s119 = ssub.s32 1024, 1024
          %120 = vsyncadd [#allocation6], %s119
          %s121 = sshll.u32 [#allocation5], 4
          %s122 = int_to_ptr.vmem [resolvable:$true] %s121
          %127 = dma.hbm_to_vmem [thread:$0]  %s1, 1024, %s122, [#allocation6], 128, 128, 8
        $region16: #{tpu_custom_call.1} parent=11 // pred_fallthru
          _
        // Predicated region
        $region17: #{tpu_custom_call.1} parent=11 // pred_check
          %p128 = pneg %p72
        $region18: #{tpu_custom_call.1} parent=11 // pred_check_branch
          %130 = sbr.rel (%p128) target = $region20
        $region19: #{tpu_custom_call.1} parent=11 // pred_region
          %s132 = ssub.s32 128, 128
          %133 = vsyncadd [#allocation9], %s132
          %s135 = sshll.u32 [#allocation8], 4
          %s136 = int_to_ptr.vmem [resolvable:$true] %s135
          %138 = dma.hbm_to_vmem [thread:$0]  %s2, 128, %s136, [#allocation9]
        $region20: #{tpu_custom_call.1} parent=11 // pred_fallthru
          _
      $region12: #{tpu_custom_call.1} parent=5 // pred_fallthru
        _
      %p139 = scmp.lt.s32.totalorder %s18, 2
      // Predicated region
      $region21: #{tpu_custom_call.1} parent=5 // pred_check
        %p140 = pneg %p139
      $region22: #{tpu_custom_call.1} parent=5 // pred_check_branch
        %142 = sbr.rel (%p140) target = $region24
      $region23: #{tpu_custom_call.1} parent=5 // pred_region
        _
      $region24: #{tpu_custom_call.1} parent=5 // pred_fallthru
        _
      %p143 = scmp.le.s32.totalorder 1, %s18
      %p144 = scmp.lt.s32.totalorder %s18, 3
      %p145 = pnand %p143, %p144
      %p146 = pneg %p145
      // Predicated region
      $region25: #{tpu_custom_call.1} parent=5 // pred_check
        _
      $region26: #{tpu_custom_call.1} parent=5 // pred_check_branch
        %148 = sbr.rel (%p145) target = $region28
      $region27: #{tpu_custom_call.1} parent=5 // pred_region
        %s149 = ssub.s32 %s18, 1
        // Predicated region
        $region29: #{tpu_custom_call.1} parent=27 // pred_check
          %p150 = pneg %p51
        $region30: #{tpu_custom_call.1} parent=27 // pred_check_branch
          %152 = sbr.rel (%p150) target = $region32
        $region31: #{tpu_custom_call.1} parent=27 // pred_region
          %153 = dma.done [#allocation6], 1024
        $region32: #{tpu_custom_call.1} parent=27 // pred_fallthru
          _
        // Predicated region
        $region33: #{tpu_custom_call.1} parent=27 // pred_check
          %p154 = pneg %p72
        $region34: #{tpu_custom_call.1} parent=27 // pred_check_branch
          %156 = sbr.rel (%p154) target = $region36
        $region35: #{tpu_custom_call.1} parent=27 // pred_region
          %157 = dma.done [#allocation9], 128
        $region36: #{tpu_custom_call.1} parent=27 // pred_fallthru
          _
        %p158 = pneg %p51
        %p159 = pneg %p48
        %p160 = pneg %p72
        %p161 = pneg %p69
        %p162 = pneg %p100
        %p163 = pneg %p97
        %s164 = sand.u32 %s87, 1
        %s165 = scalar_lea.sflag [#allocation7], %s164
        %s166 = sand.u32 %s87, 1
        %s167 = smul.addr %s166, 8
        %s168 = scalar_lea.vmem [#allocation10], %s167
        %s169 = smul.u32 %s28, 8
        %s170 = smul.u32 %s27, 8
        %s171 = sadd.s32 %s170, %s169
        %s172 = sld [smem:[#allocation4 + %s171]]
        %s173 = scalar_lea.vmem [#allocation5], %s172
        %v174 = vld [vmem:[%s173] sm:$0x1]
        %175 = vst [vmem:[#allocation2] sm:$0x1] %v174
        %s176 = sadd.s32 %s171, 1
        %s177 = sld [smem:[#allocation4 + %s176]]
        %s178 = scalar_lea.vmem [#allocation5], %s177
        %v179 = vld [vmem:[%s178] sm:$0x1]
        %180 = vst [vmem:[#allocation2 + $0x1] sm:$0x1] %v179
        %s181 = sadd.s32 %s171, 2
        %s182 = sld [smem:[#allocation4 + %s181]]
        %s183 = scalar_lea.vmem [#allocation5], %s182
        %v184 = vld [vmem:[%s183] sm:$0x1]
        %185 = vst [vmem:[#allocation2 + $0x2] sm:$0x1] %v184
        %s186 = sadd.s32 %s171, 3
        %s187 = sld [smem:[#allocation4 + %s186]]
        %s188 = scalar_lea.vmem [#allocation5], %s187
        %v189 = vld [vmem:[%s188] sm:$0x1]
        %190 = vst [vmem:[#allocation2 + $0x3] sm:$0x1] %v189
        %s191 = sadd.s32 %s171, 4
        %s192 = sld [smem:[#allocation4 + %s191]]
        %s193 = scalar_lea.vmem [#allocation5], %s192
        %v194 = vld [vmem:[%s193] sm:$0x1]
        %195 = vst [vmem:[#allocation2 + $0x4] sm:$0x1] %v194
        %s196 = sadd.s32 %s171, 5
        %s197 = sld [smem:[#allocation4 + %s196]]
        %s198 = scalar_lea.vmem [#allocation5], %s197
        %v199 = vld [vmem:[%s198] sm:$0x1]
        %200 = vst [vmem:[#allocation2 + $0x5] sm:$0x1] %v199
        %s201 = sadd.s32 %s171, 6
        %s202 = sld [smem:[#allocation4 + %s201]]
        %s203 = scalar_lea.vmem [#allocation5], %s202
        %v204 = vld [vmem:[%s203] sm:$0x1]
        %205 = vst [vmem:[#allocation2 + $0x6] sm:$0x1] %v204
        %s206 = sadd.s32 %s171, 7
        %s207 = sld [smem:[#allocation4 + %s206]]
        %s208 = scalar_lea.vmem [#allocation5], %s207
        %v209 = vld [vmem:[%s208] sm:$0x1]
        %210 = vst [vmem:[#allocation2 + $0x7] sm:$0x1] %v209
        %v211 = vld [vmem:[#allocation2] sm:$0xff]
        %s212 = scalar_lea.vmem [#allocation8], %s169
        %v213 = vld [vmem:[%s212] sm:$0xff]
        %v214 = vadd.f32 %v211, %v213
        %215 = vst [vmem:[%s168] sm:$0xff] %v214
        %s216 = sand.u32 %s87, 1
        %s217 = scalar_lea.sflag [#allocation7], %s216
        %s218 = sand.u32 %s87, 1
        %s219 = smul.addr %s218, 8
        %s220 = scalar_lea.vmem [#allocation10], %s219
        // Predicated region
        $region37: #{tpu_custom_call.1} parent=27 // pred_check
          %p221 = pneg %p97
        $region38: #{tpu_custom_call.1} parent=27 // pred_check_branch
          %223 = sbr.rel (%p221) target = $region40
        $region39: #{tpu_custom_call.1} parent=27 // pred_region
          %s225 = ssub.s32 128, 128
          %226 = vsyncadd %s217, %s225
          %s227 = sadd.s32 %s28, %s27
          %s228 = smul.addr %s227, 128
          %s229 = scalar_lea.hbm %s3, %s228
          %s231 = sshll.u32 %s220, 4
          %s232 = int_to_ptr.vmem [resolvable:$true] %s231
          %234 = dma.vmem_to_hbm [thread:$0]  %s232, 128, %s229, %s217
        $region40: #{tpu_custom_call.1} parent=27 // pred_fallthru
          _
      $region28: #{tpu_custom_call.1} parent=5 // pred_fallthru
        _
      %p235 = scmp.le.s32.totalorder 2, %s18
      // Predicated region
      $region41: #{tpu_custom_call.1} parent=5 // pred_check
        %p236 = pneg %p235
      $region42: #{tpu_custom_call.1} parent=5 // pred_check_branch
        %238 = sbr.rel (%p236) target = $region44
      $region43: #{tpu_custom_call.1} parent=5 // pred_region
        %s239 = ssub.s32 %s18, 2
        // Predicated region
        $region45: #{tpu_custom_call.1} parent=43 // pred_check
          %p240 = pneg %p103
        $region46: #{tpu_custom_call.1} parent=43 // pred_check_branch
          %242 = sbr.rel (%p240) target = $region48
        $region47: #{tpu_custom_call.1} parent=43 // pred_region
          %s243 = sand.u32 %s88, 1
          %s244 = scalar_lea.sflag [#allocation7], %s243
          %s245 = sand.u32 %s88, 1
          %s246 = smul.addr %s245, 8
          %s247 = scalar_lea.vmem [#allocation10], %s246
          %248 = dma.done %s244, 128
        $region48: #{tpu_custom_call.1} parent=43 // pred_fallthru
          _
      $region44: #{tpu_custom_call.1} parent=5 // pred_fallthru
        _
    $region6: #{tpu_custom_call.1} parent=1 // loop_footer
      %s22 = sadd.s32 1, %s18
    $region7: #{tpu_custom_call.1} parent=1 // loop_footer_branch
      %17 = sbr.rel target = $region3
    $region8: #{tpu_custom_call.1} parent=1 // loop_exit
      _
    %249 = vsyncpa [#allocation6], 1
    %s250 = scalar_lea.sflag [#allocation6], 1
    %251 = vsyncpa %s250, 1
    %252 = vsyncpa [#allocation9], 1
    %253 = vsyncpa [#allocation7], 1
    %s254 = scalar_lea.sflag [#allocation7], 1
    %255 = vsyncpa %s254, 1

</llo_original>
